<compile_context>
chip_gen: v7x
topology: tpu7x:2x2x1
jax: 0.10.0
libtpu: 0.0.40
codegen_flags: <defaults>
</compile_context>

<pallas_src>
import functools

import jax
import jax.numpy as jnp
from jax.experimental import pallas as pl
from jax.experimental.pallas import tpu as pltpu

IN_FEATURES = 28 * 28   # 784 (full last dim of x -> no lane padding needed)
HIDDEN = 128
OUT_FEATURES = 10
OUT_PAD = 128           # lane-dense output width (unmasked vst)

_VMEM_BUDGET = 40 * 1024 * 1024   # conservative double-buffer budget across v5e/v6e/v7x
_VMEM_LIMIT = 48 * 1024 * 1024    # scoped-VMEM allowance (raises v5e's 16 MiB default)


def _cdiv(a, b):
    return (a + b - 1) // b


def _round_up(x, m):
    return ((x + m - 1) // m) * m


def _choose_tile(n, tm, x_itemsize):
    """Pick the batch tile (multiple of 8 rows).

    Goals: (a) stay inside the VMEM budget (x + out tiles are double-buffered),
    (b) >= 2 grid steps when the batch allows it (v7x megacore), (c) minimal
    over-padding: tile = round_up(cdiv(n, g), 8) bounds dead rows by < 8/step.
    """
    per_row = 2 * (IN_FEATURES * x_itemsize + OUT_PAD * 4)   # double-buffered x + out
    vmem_rows = max(8, (_VMEM_BUDGET - (1 << 20)) // per_row)  # ~1 MiB for weights
    tm = max(8, min(tm, (vmem_rows // 8) * 8))

    g = max(2, _cdiv(n, tm))                 # target >= 2 grid steps (v7x: 2 TCs)
    tile = _round_up(_cdiv(n, g), 8)
    return max(8, min(tile, tm))


def mlp_kernel(x_ref, w1_ref, b1_ref, w2_ref, b2_ref, o_ref):
    # x_ref : (TM, 784)  f32/bf16   w1_ref: (784, 128) bf16   b1_ref: (1, 128) f32
    # w2_ref: (128, 128) bf16       b2_ref: (1, 128)   f32    o_ref : (TM, 128) f32
    x = x_ref[...]
    if x.dtype != jnp.bfloat16:
        x = x.astype(jnp.bfloat16)          # cast in-kernel (VPU), not in HBM
    h = jnp.dot(x, w1_ref[...], preferred_element_type=jnp.float32)
    h = jnp.maximum(h + b1_ref[...], 0.0)   # bias + ReLU in f32 (safe on v5e)
    out = jnp.dot(h.astype(jnp.bfloat16), w2_ref[...],
                  preferred_element_type=jnp.float32)
    o_ref[...] = (out + b2_ref[...]).astype(o_ref.dtype)


def pack_params(w1, b1, w2, b2):
    """One-time weight pre-pack (keep the hot path to a single pallas_call).

    Layout is (in_features, out_features); fc2 is zero-padded to 128 output
    lanes so the kernel's stores are lane-dense and unmasked.
    """
    w1_p = jnp.asarray(w1, jnp.bfloat16)                       # (784, 128)
    b1_p = jnp.asarray(b1, jnp.float32).reshape(1, HIDDEN)     # (1, 128)
    w2_p = jnp.zeros((HIDDEN, OUT_PAD), jnp.bfloat16)
    w2_p = w2_p.at[:, :OUT_FEATURES].set(jnp.asarray(w2, jnp.bfloat16))
    b2_p = jnp.zeros((1, OUT_PAD), jnp.float32)
    b2_p = b2_p.at[0, :OUT_FEATURES].set(jnp.asarray(b2, jnp.float32))
    return w1_p, b1_p, w2_p, b2_p


@functools.partial(jax.jit, static_argnames=("tm",))
def fashion_mnist_net(x_nchw, w1_p, b1_p, w2_p, b2_p, *, tm=2048):
    """Forward pass. x_nchw: (N, 1, 28, 28) -> (N, 10) float32.

    Takes pre-packed params from pack_params().  tm is an upper bound on the
    batch tile; the actual tile is derived per batch size / VMEM budget.
    """
    n = x_nchw.shape[0]
    x2d = x_nchw.reshape(n, IN_FEATURES)            # nn.Flatten(): metadata-only

    tile = _choose_tile(n, tm, jnp.dtype(x2d.dtype).itemsize)
    grid_n = _cdiv(n, tile)                         # partial boundary block is masked

    x_bytes = n * IN_FEATURES * jnp.dtype(x2d.dtype).itemsize

    out = pl.pallas_call(
        mlp_kernel,
        out_shape=jax.ShapeDtypeStruct((n, OUT_PAD), jnp.float32),
        grid=(grid_n,),
        in_specs=[
            pl.BlockSpec((tile, IN_FEATURES), lambda i: (i, 0)),   # x: tiled, pipelined
            pl.BlockSpec((IN_FEATURES, HIDDEN), lambda i: (0, 0)), # w1: VMEM-resident
            pl.BlockSpec((1, HIDDEN), lambda i: (0, 0)),           # b1: VMEM-resident
            pl.BlockSpec((HIDDEN, OUT_PAD), lambda i: (0, 0)),     # w2: VMEM-resident
            pl.BlockSpec((1, OUT_PAD), lambda i: (0, 0)),          # b2: VMEM-resident
        ],
        out_specs=pl.BlockSpec((tile, OUT_PAD), lambda i: (i, 0)),
        compiler_params=pltpu.CompilerParams(
            dimension_semantics=("parallel",),   # batch rows independent -> megacore
            vmem_limit_bytes=_VMEM_LIMIT,        # v5e default (16 MiB) is too tight
        ),
        cost_estimate=pl.CostEstimate(
            flops=2 * n * IN_FEATURES * HIDDEN + 2 * n * HIDDEN * OUT_PAD,
            transcendentals=0,
            bytes_accessed=(x_bytes                       # x streamed as-is
                            + IN_FEATURES * HIDDEN * 2    # w1 (bf16)
                            + HIDDEN * OUT_PAD * 2        # w2 (bf16)
                            + n * OUT_PAD * 4),           # out (f32)
        ),
    )(x2d, w1_p, b1_p, w2_p, b2_p)

    # Only the column slice remains (rows are exact); keep f32 per the module spec.
    return out[:, :OUT_FEATURES]


def init_params(key):
    """Deterministic init matching nn.Linear's U(-1/sqrt(fan_in), 1/sqrt(fan_in))."""
    k1, k2, k3, k4 = jax.random.split(key, 4)
    lim1 = 1.0 / jnp.sqrt(IN_FEATURES)
    w1 = jax.random.uniform(k1, (IN_FEATURES, HIDDEN), jnp.float32, -lim1, lim1)
    b1 = jax.random.uniform(k2, (HIDDEN,), jnp.float32, -lim1, lim1)
    lim2 = 1.0 / jnp.sqrt(HIDDEN)
    w2 = jax.random.uniform(k3, (HIDDEN, OUT_FEATURES), jnp.float32, -lim2, lim2)
    b2 = jax.random.uniform(k4, (OUT_FEATURES,), jnp.float32, -lim2, lim2)
    return w1, b1, w2, b2


if __name__ == "__main__":
    key = jax.random.PRNGKey(0)
    k_x, k_p = jax.random.split(key)

    batch = 2
    x = jax.random.normal(k_x, (batch, 1, 28, 28), jnp.float32)  # NCHW like PyTorch
    w1, b1, w2, b2 = init_params(k_p)
    packed = pack_params(w1, b1, w2, b2)          # one-time pre-pack (not per call)

    out = fashion_mnist_net(x, *packed)
    out = jax.block_until_ready(out)
    assert out.shape == (batch, OUT_FEATURES)

    # Reference 1: same bf16-operand / f32-accumulate math as the kernel (tight tol).
    x2d = x.reshape(batch, -1)
    h_bf = jnp.maximum(
        jnp.dot(x2d.astype(jnp.bfloat16), w1.astype(jnp.bfloat16),
                preferred_element_type=jnp.float32) + b1, 0.0)
    ref_bf = jnp.dot(h_bf.astype(jnp.bfloat16), w2.astype(jnp.bfloat16),
                     preferred_element_type=jnp.float32) + b2
    assert jnp.allclose(out, ref_bf, atol=1e-2, rtol=1e-2)

    # Reference 2: full-f32 PyTorch-equivalent math (loose tolerance for bf16 MXU ops).
    ref_f32 = jnp.maximum(x2d @ w1 + b1, 0.0) @ w2 + b2
    assert jnp.allclose(out, ref_f32, atol=5e-2, rtol=5e-2)

    print("KERNEL_OK")
</pallas_src>

<mosaic_0001>
module attributes {stable_mosaic.version = 11 : i64} {
  func.func @mlp_kernel(%arg0: i32, %arg1: memref<8x784xf32, #tpu.memory_space<vmem>>, %arg2: memref<784x128xbf16, #tpu.memory_space<vmem>>, %arg3: memref<1x128xf32, #tpu.memory_space<vmem>>, %arg4: memref<128x128xbf16, #tpu.memory_space<vmem>>, %arg5: memref<1x128xf32, #tpu.memory_space<vmem>>, %arg6: memref<8x128xf32, #tpu.memory_space<vmem>>) attributes {dimension_semantics = [#tpu.dimension_semantics<parallel>], iteration_bounds = array<i64: 1>, scalar_prefetch = 0 : i64, scratch_operands = 0 : i64, tpu.core_type = #tpu.core_type<tc>, window_params = [{transform_indices = @transform_0, window_bounds = array<i64: 8, 784>}, {pipeline_mode = #tpu.pipeline_mode<synchronous>, transform_indices = @transform_1, window_bounds = array<i64: 784, 128>}, {pipeline_mode = #tpu.pipeline_mode<synchronous>, transform_indices = @transform_2, window_bounds = array<i64: 1, 128>}, {pipeline_mode = #tpu.pipeline_mode<synchronous>, transform_indices = @transform_3, window_bounds = array<i64: 128, 128>}, {pipeline_mode = #tpu.pipeline_mode<synchronous>, transform_indices = @transform_4, window_bounds = array<i64: 1, 128>}, {transform_indices = @transform_5, window_bounds = array<i64: 8, 128>}]} {
    %c0 = arith.constant 0 : index
    %c0_0 = arith.constant 0 : index
    %0 = vector.load %arg1[%c0, %c0_0] : memref<8x784xf32, #tpu.memory_space<vmem>>, vector<8x784xf32>
    %1 = arith.truncf %0 : vector<8x784xf32> to vector<8x784xbf16>
    %c0_1 = arith.constant 0 : index
    %c0_2 = arith.constant 0 : index
    %2 = vector.load %arg2[%c0_1, %c0_2] : memref<784x128xbf16, #tpu.memory_space<vmem>>, vector<784x128xbf16>
    %cst = arith.constant dense<0.000000e+00> : vector<8x128xf32>
    %3 = tpu.matmul %1, %2, %cst {dimension_numbers = #tpu.dot_dimension_numbers<[1], [0], [0], [1], [0, 0, 1, 1], [], []>} : vector<8x784xbf16>, vector<784x128xbf16>, vector<8x128xf32> -> vector<8x128xf32>
    %c0_3 = arith.constant 0 : index
    %c0_4 = arith.constant 0 : index
    %4 = vector.load %arg3[%c0_3, %c0_4] : memref<1x128xf32, #tpu.memory_space<vmem>>, vector<1x128xf32>
    %5 = vector.broadcast %4 : vector<1x128xf32> to vector<8x128xf32>
    %6 = arith.addf %3, %5 : vector<8x128xf32>
    %cst_5 = arith.constant 0.000000e+00 : f32
    %7 = vector.broadcast %cst_5 : f32 to vector<8x128xf32>
    %8 = arith.maximumf %6, %7 : vector<8x128xf32>
    %9 = arith.truncf %8 : vector<8x128xf32> to vector<8x128xbf16>
    %c0_6 = arith.constant 0 : index
    %c0_7 = arith.constant 0 : index
    %10 = vector.load %arg4[%c0_6, %c0_7] : memref<128x128xbf16, #tpu.memory_space<vmem>>, vector<128x128xbf16>
    %cst_8 = arith.constant dense<0.000000e+00> : vector<8x128xf32>
    %11 = tpu.matmul %9, %10, %cst_8 {dimension_numbers = #tpu.dot_dimension_numbers<[1], [0], [0], [1], [0, 0, 1, 1], [], []>} : vector<8x128xbf16>, vector<128x128xbf16>, vector<8x128xf32> -> vector<8x128xf32>
    %c0_9 = arith.constant 0 : index
    %c0_10 = arith.constant 0 : index
    %12 = vector.load %arg5[%c0_9, %c0_10] : memref<1x128xf32, #tpu.memory_space<vmem>>, vector<1x128xf32>
    %13 = vector.broadcast %12 : vector<1x128xf32> to vector<8x128xf32>
    %14 = arith.addf %11, %13 : vector<8x128xf32>
    %c0_11 = arith.constant 0 : index
    %c0_12 = arith.constant 0 : index
    %15 = vector.load %arg6[%c0_11, %c0_12] : memref<8x128xf32, #tpu.memory_space<vmem>>, vector<8x128xf32>
    tpu.vector_store %arg6[%c0_11, %c0_12], %14 {strides = array<i32>} : memref<8x128xf32, #tpu.memory_space<vmem>>, vector<8x128xf32>,
    return
  }
  func.func @transform_0(%arg0: i32) -> (i32, i32) {
    %c0_i32 = arith.constant 0 : i32
    %c0_i32_0 = arith.constant 0 : i32
    return %arg0, %c0_i32 : i32, i32
  }
  func.func @transform_1(%arg0: i32) -> (i32, i32) {
    %c0_i32 = arith.constant 0 : i32
    %c0_i32_0 = arith.constant 0 : i32
    %c0_i32_1 = arith.constant 0 : i32
    return %c0_i32, %c0_i32_0 : i32, i32
  }
  func.func @transform_2(%arg0: i32) -> (i32, i32) {
    %c0_i32 = arith.constant 0 : i32
    %c0_i32_0 = arith.constant 0 : i32
    %c0_i32_1 = arith.constant 0 : i32
    return %c0_i32, %c0_i32_0 : i32, i32
  }
  func.func @transform_3(%arg0: i32) -> (i32, i32) {
    %c0_i32 = arith.constant 0 : i32
    %c0_i32_0 = arith.constant 0 : i32
    %c0_i32_1 = arith.constant 0 : i32
    return %c0_i32, %c0_i32_0 : i32, i32
  }
  func.func @transform_4(%arg0: i32) -> (i32, i32) {
    %c0_i32 = arith.constant 0 : i32
    %c0_i32_0 = arith.constant 0 : i32
    %c0_i32_1 = arith.constant 0 : i32
    return %c0_i32, %c0_i32_0 : i32, i32
  }
  func.func @transform_5(%arg0: i32) -> (i32, i32) {
    %c0_i32 = arith.constant 0 : i32
    %c0_i32_0 = arith.constant 0 : i32
    return %arg0, %c0_i32 : i32, i32
  }
}

</mosaic_0001>

<llo_original>
// kernel: fashion_mnist_net.1
$region0: #{fashion_mnist_net.1}
  #allocation0 [shape = 'u32[]', space=smem, size = 0x4, offset = 0x4, fixed_abs, tag = 'smem constant byte address 0x4 - core index']
  #allocation1 [shape = 'u32[144,128]{1,0:T(1,128)}', space=vmem, size = 0x12000, scoped, tag = 'internal scratch']
  %s0 = inlined_call_operand.vmem [shape: f32[2,784], index: 0, kind: input, shape index: {}]
  %s1 = inlined_call_operand.hbm [shape: bf16[784,128], index: 1, kind: input, shape index: {}]
  %s2 = inlined_call_operand.vmem [shape: f32[1,128], index: 2, kind: input, shape index: {}]
  %s3 = inlined_call_operand.vmem [shape: bf16[128,128], index: 3, kind: input, shape index: {}]
  %s4 = inlined_call_operand.vmem [shape: f32[1,128], index: 4, kind: input, shape index: {}]
  %s5 = inlined_call_operand.hbm [shape: f32[2,128], index: 5, kind: output, shape index: {}]
  %s6 = sld [smem:[#allocation0]]
  $region34: #{fashion_mnist_net.1} parent=0
    _
  %s8 = ssub.s32 1, %s6
  %s9 = scalar_select 0, %s8, %s6
  $region1: #{fashion_mnist_net.1} parent=0
    #allocation2 [shape = 'u8[200704]{0}', space=vmem, size = 0x31000, scoped, tag = 'input window, operand 1, single buffered']
    #allocation3 [shape = 's32[1]{0}', space=sflag, size = 0x4, scoped, tag = 'scoped memory for fashion_mnist_net.1']
    #allocation4 [shape = 's32[1]{0}', space=sflag, size = 0x4, scoped, tag = 'scoped memory for fashion_mnist_net.1']
    #allocation5 [shape = 'u8[4096]{0}', space=vmem, size = 0x1000, scoped, tag = 'output window, operand 0, single buffered']
    %10 = vsyncpa [#allocation3], 0
    %11 = vsyncpa [#allocation4], 0
    // Predicated region
    $region2: #{fashion_mnist_net.1} parent=1 // pred_check
      _
    $region3: #{fashion_mnist_net.1} parent=1 // pred_check_branch
      %13 = sbr.rel (0) target = $region5
    $region4: #{fashion_mnist_net.1} parent=1 // pred_region
      _
    $region5: #{fashion_mnist_net.1} parent=1 // pred_fallthru
      _
    // Predicated region
    $region6: #{fashion_mnist_net.1} parent=1 // pred_check
      _
    $region7: #{fashion_mnist_net.1} parent=1 // pred_check_branch
      %15 = sbr.rel (0) target = $region9
    $region8: #{fashion_mnist_net.1} parent=1 // pred_region
      %s17 = ssub.s32 6272, 6272
      %18 = vsyncadd [#allocation3], %s17
      %s19 = sshll.u32 [#allocation2], 4
      %s20 = int_to_ptr.vmem [resolvable:$true] %s19
      %25 = dma.hbm_to_vmem [thread:$0]  %s1, 6272, %s20, [#allocation3], 64, 64, 4
    $region9: #{fashion_mnist_net.1} parent=1 // pred_fallthru
      _
    // Predicated region
    $region10: #{fashion_mnist_net.1} parent=1 // pred_check
      _
    $region11: #{fashion_mnist_net.1} parent=1 // pred_check_branch
      %27 = sbr.rel (0) target = $region13
    $region12: #{fashion_mnist_net.1} parent=1 // pred_region
      _
    $region13: #{fashion_mnist_net.1} parent=1 // pred_fallthru
      _
    // Predicated region
    $region14: #{fashion_mnist_net.1} parent=1 // pred_check
      _
    $region15: #{fashion_mnist_net.1} parent=1 // pred_check_branch
      %29 = sbr.rel (0) target = $region17
    $region16: #{fashion_mnist_net.1} parent=1 // pred_region
      _
    $region17: #{fashion_mnist_net.1} parent=1 // pred_fallthru
      _
    // Predicated region
    $region18: #{fashion_mnist_net.1} parent=1 // pred_check
      _
    $region19: #{fashion_mnist_net.1} parent=1 // pred_check_branch
      %31 = sbr.rel (0) target = $region21
    $region20: #{fashion_mnist_net.1} parent=1 // pred_region
      _
    $region21: #{fashion_mnist_net.1} parent=1 // pred_fallthru
      _
    // Predicated region
    $region22: #{fashion_mnist_net.1} parent=1 // pred_check
      _
    $region23: #{fashion_mnist_net.1} parent=1 // pred_check_branch
      %33 = sbr.rel (0) target = $region25
    $region24: #{fashion_mnist_net.1} parent=1 // pred_region
      %34 = dma.done [#allocation3], 6272
    $region25: #{fashion_mnist_net.1} parent=1 // pred_fallthru
      _
    %v36 = vld [vmem:[%s0] sm:$0xff]
    %v37 = vld [vmem:[%s0 + $0x8] sm:$0x3f]
    %v38 = vld [vmem:[%s0 + $0xe] sm:$0xff]
    %v39 = vld [vmem:[%s0 + $0x16] sm:$0x3f]
    %v40 = vld [vmem:[%s0 + $0x1c] sm:$0xff]
    %v41 = vld [vmem:[%s0 + $0x24] sm:$0x3f]
    %v42 = vld [vmem:[%s0 + $0x2a] sm:$0xff]
    %v43 = vld [vmem:[%s0 + $0x32] sm:$0x3f]
    %v52 = vcombine.low %v36, %v38
    %v53 = vcombine.high %v36, %v38
    %v54 = vcombine.low %v40, %v42
    %v55 = vcombine.high %v40, %v42
    %v57 = vunpack.c.l.s4 1983009808
    %v58 = vunpack.c.0.s8 %v57
    %v59 = vlaneseq
    %v60 = vshrl.u32 %v59, 7
    %v61 = vsub.s32 %v58, %v60
    %v62 = vrot.slane %v52, %v61
    %v64 = vunpack.c.l.s4 1983009808
    %v65 = vunpack.c.0.s8 %v64
    %v66 = vlaneseq
    %v67 = vshrl.u32 %v66, 7
    %v68 = vsub.s32 %v65, %v67
    %v69 = vrot.slane %v53, %v68
    %v71 = vunpack.c.l.s4 1983009808
    %v72 = vunpack.c.0.s8 %v71
    %v73 = vlaneseq
    %v74 = vshrl.u32 %v73, 7
    %v75 = vsub.s32 %v72, %v74
    %v76 = vrot.slane %v54, %v75
    %v78 = vunpack.c.l.s4 1983009808
    %v79 = vunpack.c.0.s8 %v78
    %v80 = vlaneseq
    %v81 = vshrl.u32 %v80, 7
    %v82 = vsub.s32 %v79, %v81
    %v83 = vrot.slane %v55, %v82
    %v84 = vcombine.low %v62, %v76
    %v85 = vcombine.high %v62, %v76
    %v86 = vcombine.low %v69, %v83
    %v87 = vcombine.high %v69, %v83
    %v88 = vcombine.low %v37, %v39
    %v89 = vcombine.high %v37, %v39
    %v90 = vcombine.low %v41, %v43
    %v91 = vcombine.high %v41, %v43
    %v93 = vunpack.c.l.s4 1983009808
    %v94 = vunpack.c.0.s8 %v93
    %v95 = vlaneseq
    %v96 = vshrl.u32 %v95, 7
    %v97 = vsub.s32 %v94, %v96
    %v98 = vrot.slane %v88, %v97
    %v100 = vunpack.c.l.s4 1983009808
    %v101 = vunpack.c.0.s8 %v100
    %v102 = vlaneseq
    %v103 = vshrl.u32 %v102, 7
    %v104 = vsub.s32 %v101, %v103
    %v105 = vrot.slane %v89, %v104
    %v107 = vunpack.c.l.s4 1983009808
    %v108 = vunpack.c.0.s8 %v107
    %v109 = vlaneseq
    %v110 = vshrl.u32 %v109, 7
    %v111 = vsub.s32 %v108, %v110
    %v112 = vrot.slane %v90, %v111
    %v114 = vunpack.c.l.s4 1983009808
    %v115 = vunpack.c.0.s8 %v114
    %v116 = vlaneseq
    %v117 = vshrl.u32 %v116, 7
    %v118 = vsub.s32 %v115, %v117
    %v119 = vrot.slane %v91, %v118
    %v120 = vcombine.low %v98, %v112
    %v121 = vcombine.high %v98, %v112
    %v122 = vcombine.low %v105, %v119
    %v130 = vpack.c.bf16 %v84, %v84
    %v131 = vpack.c.bf16 %v85, %v85
    %v132 = vpack.c.bf16 %v86, %v86
    %v133 = vpack.c.bf16 %v87, %v87
    %v134 = vpack.c.bf16 %v120, %v120
    %v135 = vpack.c.bf16 %v121, %v121
    %v136 = vpack.c.bf16 %v122, %v122
    %v137 = vld [vmem:[#allocation2] sm:$0xf]
    %v138 = vld [vmem:[#allocation2 + $0x4] sm:$0xf]
    %v139 = vld [vmem:[#allocation2 + $0x8] sm:$0xf]
    %v140 = vld [vmem:[#allocation2 + $0xc] sm:$0xf]
    %v141 = vld [vmem:[#allocation2 + $0x10] sm:$0xf]
    %v142 = vld [vmem:[#allocation2 + $0x14] sm:$0xf]
    %v143 = vld [vmem:[#allocation2 + $0x18] sm:$0xf]
    %v144 = vld [vmem:[#allocation2 + $0x1c] sm:$0xf]
    %v145 = vld [vmem:[#allocation2 + $0x20] sm:$0xf]
    %v146 = vld [vmem:[#allocation2 + $0x24] sm:$0xf]
    %v147 = vld [vmem:[#allocation2 + $0x28] sm:$0xf]
    %v148 = vld [vmem:[#allocation2 + $0x2c] sm:$0xf]
    %v149 = vld [vmem:[#allocation2 + $0x30] sm:$0xf]
    %v150 = vld [vmem:[#allocation2 + $0x34] sm:$0xf]
    %v151 = vld [vmem:[#allocation2 + $0x38] sm:$0xf]
    %v152 = vld [vmem:[#allocation2 + $0x3c] sm:$0xf]
    %v153 = vld [vmem:[#allocation2 + $0x40] sm:$0xf]
    %v154 = vld [vmem:[#allocation2 + $0x44] sm:$0xf]
    %v155 = vld [vmem:[#allocation2 + $0x48] sm:$0xf]
    %v156 = vld [vmem:[#allocation2 + $0x4c] sm:$0xf]
    %v157 = vld [vmem:[#allocation2 + $0x50] sm:$0xf]
    %v158 = vld [vmem:[#allocation2 + $0x54] sm:$0xf]
    %v159 = vld [vmem:[#allocation2 + $0x58] sm:$0xf]
    %v160 = vld [vmem:[#allocation2 + $0x5c] sm:$0xf]
    %v161 = vld [vmem:[#allocation2 + $0x60] sm:$0xf]
    %v162 = vld [vmem:[#allocation2 + $0x64] sm:$0xf]
    %v163 = vld [vmem:[#allocation2 + $0x68] sm:$0xf]
    %v164 = vld [vmem:[#allocation2 + $0x6c] sm:$0xf]
    %v165 = vld [vmem:[#allocation2 + $0x70] sm:$0xf]
    %v166 = vld [vmem:[#allocation2 + $0x74] sm:$0xf]
    %v167 = vld [vmem:[#allocation2 + $0x78] sm:$0xf]
    %v168 = vld [vmem:[#allocation2 + $0x7c] sm:$0xf]
    %v169 = vld [vmem:[#allocation2 + $0x80] sm:$0xf]
    %v170 = vld [vmem:[#allocation2 + $0x84] sm:$0xf]
    %v171 = vld [vmem:[#allocation2 + $0x88] sm:$0xf]
    %v172 = vld [vmem:[#allocation2 + $0x8c] sm:$0xf]
    %v173 = vld [vmem:[#allocation2 + $0x90] sm:$0xf]
    %v174 = vld [vmem:[#allocation2 + $0x94] sm:$0xf]
    %v175 = vld [vmem:[#allocation2 + $0x98] sm:$0xf]
    %v176 = vld [vmem:[#allocation2 + $0x9c] sm:$0xf]
    %v177 = vld [vmem:[#allocation2 + $0xa0] sm:$0xf]
    %v178 = vld [vmem:[#allocation2 + $0xa4] sm:$0xf]
    %v179 = vld [vmem:[#allocation2 + $0xa8] sm:$0xf]
    %v180 = vld [vmem:[#allocation2 + $0xac] sm:$0xf]
    %v181 = vld [vmem:[#allocation2 + $0xb0] sm:$0xf]
    %v182 = vld [vmem:[#allocation2 + $0xb4] sm:$0xf]
    %v183 = vld [vmem:[#allocation2 + $0xb8] sm:$0xf]
    %v184 = vld [vmem:[#allocation2 + $0xbc] sm:$0xf]
    %v185 = vld [vmem:[#allocation2 + $0xc0] sm:$0xf]
    %v186 = vld [vmem:[#allocation2 + $0xc4] sm:$0xf]
    %v187 = vld [vmem:[#allocation2 + $0xc8] sm:$0xf]
    %v188 = vld [vmem:[#allocation2 + $0xcc] sm:$0xf]
    %v189 = vld [vmem:[#allocation2 + $0xd0] sm:$0xf]
    %v190 = vld [vmem:[#allocation2 + $0xd4] sm:$0xf]
    %v191 = vld [vmem:[#allocation2 + $0xd8] sm:$0xf]
    %v192 = vld [vmem:[#allocation2 + $0xdc] sm:$0xf]
    %v193 = vld [vmem:[#allocation2 + $0xe0] sm:$0xf]
    %v194 = vld [vmem:[#allocation2 + $0xe4] sm:$0xf]
    %v195 = vld [vmem:[#allocation2 + $0xe8] sm:$0xf]
    %v196 = vld [vmem:[#allocation2 + $0xec] sm:$0xf]
    %v197 = vld [vmem:[#allocation2 + $0xf0] sm:$0xf]
    %v198 = vld [vmem:[#allocation2 + $0xf4] sm:$0xf]
    %v199 = vld [vmem:[#allocation2 + $0xf8] sm:$0xf]
    %v200 = vld [vmem:[#allocation2 + $0xfc] sm:$0xf]
    %v201 = vld [vmem:[#allocation2 + $0x100] sm:$0xf]
    %v202 = vld [vmem:[#allocation2 + $0x104] sm:$0xf]
    %v203 = vld [vmem:[#allocation2 + $0x108] sm:$0xf]
    %v204 = vld [vmem:[#allocation2 + $0x10c] sm:$0xf]
    %v205 = vld [vmem:[#allocation2 + $0x110] sm:$0xf]
    %v206 = vld [vmem:[#allocation2 + $0x114] sm:$0xf]
    %v207 = vld [vmem:[#allocation2 + $0x118] sm:$0xf]
    %v208 = vld [vmem:[#allocation2 + $0x11c] sm:$0xf]
    %v209 = vld [vmem:[#allocation2 + $0x120] sm:$0xf]
    %v210 = vld [vmem:[#allocation2 + $0x124] sm:$0xf]
    %v211 = vld [vmem:[#allocation2 + $0x128] sm:$0xf]
    %v212 = vld [vmem:[#allocation2 + $0x12c] sm:$0xf]
    %v213 = vld [vmem:[#allocation2 + $0x130] sm:$0xf]
    %v214 = vld [vmem:[#allocation2 + $0x134] sm:$0xf]
    %v215 = vld [vmem:[#allocation2 + $0x138] sm:$0xf]
    %v216 = vld [vmem:[#allocation2 + $0x13c] sm:$0xf]
    %v217 = vld [vmem:[#allocation2 + $0x140] sm:$0xf]
    %v218 = vld [vmem:[#allocation2 + $0x144] sm:$0xf]
    %v219 = vld [vmem:[#allocation2 + $0x148] sm:$0xf]
    %v220 = vld [vmem:[#allocation2 + $0x14c] sm:$0xf]
    %v221 = vld [vmem:[#allocation2 + $0x150] sm:$0xf]
    %v222 = vld [vmem:[#allocation2 + $0x154] sm:$0xf]
    %v223 = vld [vmem:[#allocation2 + $0x158] sm:$0xf]
    %v224 = vld [vmem:[#allocation2 + $0x15c] sm:$0xf]
    %v225 = vld [vmem:[#allocation2 + $0x160] sm:$0xf]
    %v226 = vld [vmem:[#allocation2 + $0x164] sm:$0xf]
    %v227 = vld [vmem:[#allocation2 + $0x168] sm:$0xf]
    %v228 = vld [vmem:[#allocation2 + $0x16c] sm:$0xf]
    %v229 = vld [vmem:[#allocation2 + $0x170] sm:$0xf]
    %v230 = vld [vmem:[#allocation2 + $0x174] sm:$0xf]
    %v231 = vld [vmem:[#allocation2 + $0x178] sm:$0xf]
    %v232 = vld [vmem:[#allocation2 + $0x17c] sm:$0xf]
    %v233 = vld [vmem:[#allocation2 + $0x180] sm:$0xf]
    %v234 = vld [vmem:[#allocation2 + $0x184] sm:$0xf]
    %v235 = vld [vmem:[%s2] sm:$0x1]
    %v237 = vlaneseq
    %v238 = vshrl.u32 %v237, 7
    %v239 = vsub.s32 0, %v238
    %v240 = vrot.slane %v235, %v239
    %v340 = vunpack.c.l.b16 %v137
    %v341 = vunpack.c.l.b16 %v138
    %v342 = vunpack.c.l.b16 %v139
    %v343 = vunpack.c.l.b16 %v140
    %v344 = vunpack.c.l.b16 %v141
    %v345 = vunpack.c.l.b16 %v142
    %v346 = vunpack.c.l.b16 %v143
    %v347 = vunpack.c.l.b16 %v144
    %v348 = vunpack.c.l.b16 %v145
    %v349 = vunpack.c.l.b16 %v146
    %v350 = vunpack.c.l.b16 %v147
    %v351 = vunpack.c.l.b16 %v148
    %v352 = vunpack.c.l.b16 %v149
    %v353 = vunpack.c.l.b16 %v150
    %v354 = vunpack.c.l.b16 %v151
    %v355 = vunpack.c.l.b16 %v152
    %v356 = vunpack.c.l.b16 %v153
    %v357 = vunpack.c.l.b16 %v154
    %v358 = vunpack.c.l.b16 %v155
    %v359 = vunpack.c.l.b16 %v156
    %v360 = vunpack.c.l.b16 %v157
    %v361 = vunpack.c.l.b16 %v158
    %v362 = vunpack.c.l.b16 %v159
    %v363 = vunpack.c.l.b16 %v160
    %v364 = vunpack.c.l.b16 %v161
    %v365 = vunpack.c.l.b16 %v162
    %v366 = vunpack.c.l.b16 %v163
    %v367 = vunpack.c.l.b16 %v164
    %v368 = vunpack.c.l.b16 %v165
    %v369 = vunpack.c.l.b16 %v166
    %v370 = vunpack.c.l.b16 %v167
    %v371 = vunpack.c.l.b16 %v168
    %v372 = vunpack.c.l.b16 %v169
    %v373 = vunpack.c.l.b16 %v170
    %v374 = vunpack.c.l.b16 %v171
    %v375 = vunpack.c.l.b16 %v172
    %v376 = vunpack.c.l.b16 %v173
    %v377 = vunpack.c.l.b16 %v174
    %v378 = vunpack.c.l.b16 %v175
    %v379 = vunpack.c.l.b16 %v176
    %v380 = vunpack.c.l.b16 %v177
    %v381 = vunpack.c.l.b16 %v178
    %v382 = vunpack.c.l.b16 %v179
    %v383 = vunpack.c.l.b16 %v180
    %v384 = vunpack.c.l.b16 %v181
    %v385 = vunpack.c.l.b16 %v182
    %v386 = vunpack.c.l.b16 %v183
    %v387 = vunpack.c.l.b16 %v184
    %v388 = vunpack.c.l.b16 %v185
    %v389 = vunpack.c.l.b16 %v186
    %v390 = vunpack.c.l.b16 %v187
    %v391 = vunpack.c.l.b16 %v188
    %v392 = vunpack.c.l.b16 %v189
    %v393 = vunpack.c.l.b16 %v190
    %v394 = vunpack.c.l.b16 %v191
    %v395 = vunpack.c.l.b16 %v192
    %v396 = vunpack.c.l.b16 %v193
    %v397 = vunpack.c.l.b16 %v194
    %v398 = vunpack.c.l.b16 %v195
    %v399 = vunpack.c.l.b16 %v196
    %v400 = vunpack.c.l.b16 %v197
    %v401 = vunpack.c.l.b16 %v198
    %v402 = vunpack.c.l.b16 %v199
    %v403 = vunpack.c.l.b16 %v200
    %v404 = vunpack.c.l.b16 %v201
    %v405 = vunpack.c.l.b16 %v202
    %v406 = vunpack.c.l.b16 %v203
    %v407 = vunpack.c.l.b16 %v204
    %v408 = vunpack.c.l.b16 %v205
    %v409 = vunpack.c.l.b16 %v206
    %v410 = vunpack.c.l.b16 %v207
    %v411 = vunpack.c.l.b16 %v208
    %v412 = vunpack.c.l.b16 %v209
    %v413 = vunpack.c.l.b16 %v210
    %v414 = vunpack.c.l.b16 %v211
    %v415 = vunpack.c.l.b16 %v212
    %v416 = vunpack.c.l.b16 %v213
    %v417 = vunpack.c.l.b16 %v214
    %v418 = vunpack.c.l.b16 %v215
    %v419 = vunpack.c.l.b16 %v216
    %v420 = vunpack.c.l.b16 %v217
    %v421 = vunpack.c.l.b16 %v218
    %v422 = vunpack.c.l.b16 %v219
    %v423 = vunpack.c.l.b16 %v220
    %v424 = vunpack.c.l.b16 %v221
    %v425 = vunpack.c.l.b16 %v222
    %v426 = vunpack.c.l.b16 %v223
    %v427 = vunpack.c.l.b16 %v224
    %v428 = vunpack.c.l.b16 %v225
    %v429 = vunpack.c.l.b16 %v226
    %v430 = vunpack.c.l.b16 %v227
    %v431 = vunpack.c.l.b16 %v228
    %v432 = vunpack.c.l.b16 %v229
    %v433 = vunpack.c.l.b16 %v230
    %v434 = vunpack.c.l.b16 %v231
    %v435 = vunpack.c.l.b16 %v232
    %v436 = vunpack.c.l.b16 %v233
    %v437 = vunpack.c.l.b16 %v234
    %v438 = vpack.c.b16 %v341, %v340
    %v439 = vpack.c.b16 %v343, %v342
    %v440 = vpack.c.b16 %v345, %v344
    %v441 = vpack.c.b16 %v347, %v346
    %v442 = vpack.c.b16 %v349, %v348
    %v443 = vpack.c.b16 %v351, %v350
    %v444 = vpack.c.b16 %v353, %v352
    %v445 = vpack.c.b16 %v355, %v354
    %v446 = vpack.c.b16 %v357, %v356
    %v447 = vpack.c.b16 %v359, %v358
    %v448 = vpack.c.b16 %v361, %v360
    %v449 = vpack.c.b16 %v363, %v362
    %v450 = vpack.c.b16 %v365, %v364
    %v451 = vpack.c.b16 %v367, %v366
    %v452 = vpack.c.b16 %v369, %v368
    %v453 = vpack.c.b16 %v371, %v370
    %v454 = vpack.c.b16 %v373, %v372
    %v455 = vpack.c.b16 %v375, %v374
    %v456 = vpack.c.b16 %v377, %v376
    %v457 = vpack.c.b16 %v379, %v378
    %v458 = vpack.c.b16 %v381, %v380
    %v459 = vpack.c.b16 %v383, %v382
    %v460 = vpack.c.b16 %v385, %v384
    %v461 = vpack.c.b16 %v387, %v386
    %v462 = vpack.c.b16 %v389, %v388
    %v463 = vpack.c.b16 %v391, %v390
    %v464 = vpack.c.b16 %v393, %v392
    %v465 = vpack.c.b16 %v395, %v394
    %v466 = vpack.c.b16 %v397, %v396
    %v467 = vpack.c.b16 %v399, %v398
    %v468 = vpack.c.b16 %v401, %v400
    %v469 = vpack.c.b16 %v403, %v402
    %v470 = vpack.c.b16 %v405, %v404
    %v471 = vpack.c.b16 %v407, %v406
    %v472 = vpack.c.b16 %v409, %v408
    %v473 = vpack.c.b16 %v411, %v410
    %v474 = vpack.c.b16 %v413, %v412
    %v475 = vpack.c.b16 %v415, %v414
    %v476 = vpack.c.b16 %v417, %v416
    %v477 = vpack.c.b16 %v419, %v418
    %v478 = vpack.c.b16 %v421, %v420
    %v479 = vpack.c.b16 %v423, %v422
    %v480 = vpack.c.b16 %v425, %v424
    %v481 = vpack.c.b16 %v427, %v426
    %v482 = vpack.c.b16 %v429, %v428
    %v483 = vpack.c.b16 %v431, %v430
    %v484 = vpack.c.b16 %v433, %v432
    %v485 = vpack.c.b16 %v435, %v434
    %v486 = vpack.c.b16 %v437, %v436
    %vm536 = vcmask 130048
    %v538 = vsel %vm536, %v136, 0
    %540 = vmatprep.subr.bf16.mxu0 0
    %541 = vmatpush1.bf16.msra.mxu0 %v438
    %542 = vmatprep.subr.bf16.mxu0 0
    %543 = vmatpush1.bf16.msra.mxu0 %v439
    %544 = vmatprep.subr.bf16.mxu0 0
    %545 = vmatpush1.bf16.msra.mxu0 %v440
    %546 = vmatprep.subr.bf16.mxu0 0
    %547 = vmatpush1.bf16.msra.mxu0 %v441
    %548 = vmatprep.subr.bf16.mxu0 0
    %549 = vmatpush1.bf16.msra.mxu0 %v442
    %550 = vmatprep.subr.bf16.mxu0 0
    %551 = vmatpush1.bf16.msra.mxu0 %v443
    %552 = vmatprep.subr.bf16.mxu0 0
    %553 = vmatpush1.bf16.msra.mxu0 %v444
    %554 = vmatprep.subr.bf16.mxu0 0
    %555 = vmatpush1.bf16.msra.mxu0 %v445
    %556 = vmatprep.subr.bf16.mxu0 0
    %557 = vmatpush1.bf16.msra.mxu0 %v446
    %558 = vmatprep.subr.bf16.mxu0 0
    %559 = vmatpush1.bf16.msra.mxu0 %v447
    %560 = vmatprep.subr.bf16.mxu0 0
    %561 = vmatpush1.bf16.msra.mxu0 %v448
    %562 = vmatprep.subr.bf16.mxu0 0
    %563 = vmatpush1.bf16.msra.mxu0 %v449
    %564 = vmatprep.subr.bf16.mxu0 0
    %565 = vmatpush1.bf16.msra.mxu0 %v450
    %566 = vmatprep.subr.bf16.mxu0 0
    %567 = vmatpush1.bf16.msra.mxu0 %v451
    %568 = vmatprep.subr.bf16.mxu0 0
    %569 = vmatpush1.bf16.msra.mxu0 %v452
    %570 = vmatprep.subr.bf16.mxu0 0
    %571 = vmatpush1.bf16.msra.mxu0 %v453
    %572 = vmatprep.mubr.bf16.mxu0 %v131
    %573 = vmatmul.mubr.bf16.gmra.mrb[0].mxu0 %v130
    %v574 = vpop.f32.mrb[0].mxu0
    %v575 = vadd.f32 %v240, %v574
    %v576 = vpop.f32.mrb[0].mxu0
    %v577 = vpop.f32.mrb[0].mxu0
    %v578 = vpop.f32.mrb[0].mxu0
    %579 = vdwg.mxu0
    %580 = vmatprep.subr.bf16.mxu0 0
    %581 = vmatpush1.bf16.msra.mxu0 %v454
    %582 = vmatprep.subr.bf16.mxu0 0
    %583 = vmatpush1.bf16.msra.mxu0 %v455
    %584 = vmatprep.subr.bf16.mxu0 0
    %585 = vmatpush1.bf16.msra.mxu0 %v456
    %586 = vmatprep.subr.bf16.mxu0 0
    %587 = vmatpush1.bf16.msra.mxu0 %v457
    %588 = vmatprep.subr.bf16.mxu0 0
    %589 = vmatpush1.bf16.msra.mxu0 %v458
    %590 = vmatprep.subr.bf16.mxu0 0
    %591 = vmatpush1.bf16.msra.mxu0 %v459
    %592 = vmatprep.subr.bf16.mxu0 0
    %593 = vmatpush1.bf16.msra.mxu0 %v460
    %594 = vmatprep.subr.bf16.mxu0 0
    %595 = vmatpush1.bf16.msra.mxu0 %v461
    %596 = vmatprep.subr.bf16.mxu0 0
    %597 = vmatpush1.bf16.msra.mxu0 %v462
    %598 = vmatprep.subr.bf16.mxu0 0
    %599 = vmatpush1.bf16.msra.mxu0 %v463
    %600 = vmatprep.subr.bf16.mxu0 0
    %601 = vmatpush1.bf16.msra.mxu0 %v464
    %602 = vmatprep.subr.bf16.mxu0 0
    %603 = vmatpush1.bf16.msra.mxu0 %v465
    %604 = vmatprep.subr.bf16.mxu0 0
    %605 = vmatpush1.bf16.msra.mxu0 %v466
    %606 = vmatprep.subr.bf16.mxu0 0
    %607 = vmatpush1.bf16.msra.mxu0 %v467
    %608 = vmatprep.subr.bf16.mxu0 0
    %609 = vmatpush1.bf16.msra.mxu0 %v468
    %610 = vmatprep.subr.bf16.mxu0 0
    %611 = vmatpush1.bf16.msra.mxu0 %v469
    %612 = vmatprep.mubr.bf16.mxu0 %v133
    %613 = vmatmul.mubr.bf16.gmra.mrb[0].mxu0 %v132
    %v614 = vpop.f32.mrb[0].mxu0
    %v615 = vadd.f32 %v575, %v614
    %v616 = vpop.f32.mrb[0].mxu0
    %v617 = vpop.f32.mrb[0].mxu0
    %v618 = vpop.f32.mrb[0].mxu0
    %619 = vdwg.mxu0
    %620 = vmatprep.subr.bf16.mxu0 0
    %621 = vmatpush1.bf16.msra.mxu0 %v470
    %622 = vmatprep.subr.bf16.mxu0 0
    %623 = vmatpush1.bf16.msra.mxu0 %v471
    %624 = vmatprep.subr.bf16.mxu0 0
    %625 = vmatpush1.bf16.msra.mxu0 %v472
    %626 = vmatprep.subr.bf16.mxu0 0
    %627 = vmatpush1.bf16.msra.mxu0 %v473
    %628 = vmatprep.subr.bf16.mxu0 0
    %629 = vmatpush1.bf16.msra.mxu0 %v474
    %630 = vmatprep.subr.bf16.mxu0 0
    %631 = vmatpush1.bf16.msra.mxu0 %v475
    %632 = vmatprep.subr.bf16.mxu0 0
    %633 = vmatpush1.bf16.msra.mxu0 %v476
    %634 = vmatprep.subr.bf16.mxu0 0
    %635 = vmatpush1.bf16.msra.mxu0 %v477
    %636 = vmatprep.subr.bf16.mxu0 0
    %637 = vmatpush1.bf16.msra.mxu0 %v478
    %638 = vmatprep.subr.bf16.mxu0 0
    %639 = vmatpush1.bf16.msra.mxu0 %v479
    %640 = vmatprep.subr.bf16.mxu0 0
    %641 = vmatpush1.bf16.msra.mxu0 %v480
    %642 = vmatprep.subr.bf16.mxu0 0
    %643 = vmatpush1.bf16.msra.mxu0 %v481
    %644 = vmatprep.subr.bf16.mxu0 0
    %645 = vmatpush1.bf16.msra.mxu0 %v482
    %646 = vmatprep.subr.bf16.mxu0 0
    %647 = vmatpush1.bf16.msra.mxu0 %v483
    %648 = vmatprep.subr.bf16.mxu0 0
    %649 = vmatpush1.bf16.msra.mxu0 %v484
    %650 = vmatprep.subr.bf16.mxu0 0
    %651 = vmatpush1.bf16.msra.mxu0 %v485
    %652 = vmatprep.mubr.bf16.mxu0 %v135
    %653 = vmatmul.mubr.bf16.gmra.mrb[0].mxu0 %v134
    %v654 = vpop.f32.mrb[0].mxu0
    %v655 = vadd.f32 %v615, %v654
    %v656 = vpop.f32.mrb[0].mxu0
    %v657 = vpop.f32.mrb[0].mxu0
    %v658 = vpop.f32.mrb[0].mxu0
    %659 = vdwg.mxu0
    %660 = vmatprep.subr.bf16.mxu0 0
    %661 = vmatpush1.bf16.msra.mxu0 %v486
    %662 = vmatprep.subr.bf16.mxu0 0
    %663 = vmatpush1.bf16.msra.mxu0 0
    %664 = vmatprep.subr.bf16.mxu0 0
    %665 = vmatpush1.bf16.msra.mxu0 0
    %666 = vmatprep.subr.bf16.mxu0 0
    %667 = vmatpush1.bf16.msra.mxu0 0
    %668 = vmatprep.subr.bf16.mxu0 0
    %669 = vmatpush1.bf16.msra.mxu0 0
    %670 = vmatprep.subr.bf16.mxu0 0
    %671 = vmatpush1.bf16.msra.mxu0 0
    %672 = vmatprep.subr.bf16.mxu0 0
    %673 = vmatpush1.bf16.msra.mxu0 0
    %674 = vmatprep.subr.bf16.mxu0 0
    %675 = vmatpush1.bf16.msra.mxu0 0
    %676 = vmatprep.subr.bf16.mxu0 0
    %677 = vmatpush1.bf16.msra.mxu0 0
    %678 = vmatprep.subr.bf16.mxu0 0
    %679 = vmatpush1.bf16.msra.mxu0 0
    %680 = vmatprep.subr.bf16.mxu0 0
    %681 = vmatpush1.bf16.msra.mxu0 0
    %682 = vmatprep.subr.bf16.mxu0 0
    %683 = vmatpush1.bf16.msra.mxu0 0
    %684 = vmatprep.subr.bf16.mxu0 0
    %685 = vmatpush1.bf16.msra.mxu0 0
    %686 = vmatprep.subr.bf16.mxu0 0
    %687 = vmatpush1.bf16.msra.mxu0 0
    %688 = vmatprep.subr.bf16.mxu0 0
    %689 = vmatpush1.bf16.msra.mxu0 0
    %690 = vmatprep.subr.bf16.mxu0 0
    %691 = vmatpush1.bf16.msra.mxu0 0
    %692 = vmatprep.mubr.bf16.mxu0 0
    %693 = vmatmul.mubr.bf16.gmra.mrb[0].mxu0 %v538
    %v694 = vpop.f32.mrb[0].mxu0
    %v695 = vadd.f32 %v655, %v694
    %v696 = vpop.f32.mrb[0].mxu0
    %v697 = vpop.f32.mrb[0].mxu0
    %v698 = vpop.f32.mrb[0].mxu0
    %699 = vdwg.mxu0
    %v700 = vmax.f32 %v695, 0.0
    %v701 = vpack.c.bf16 %v700, %v700
    %v702 = vld [vmem:[%s3] sm:$0xf]
    %v703 = vld [vmem:[%s3 + $0x4] sm:$0xf]
    %v704 = vld [vmem:[%s3 + $0x8] sm:$0xf]
    %v705 = vld [vmem:[%s3 + $0xc] sm:$0xf]
    %v706 = vld [vmem:[%s3 + $0x10] sm:$0xf]
    %v707 = vld [vmem:[%s3 + $0x14] sm:$0xf]
    %v708 = vld [vmem:[%s3 + $0x18] sm:$0xf]
    %v709 = vld [vmem:[%s3 + $0x1c] sm:$0xf]
    %v710 = vld [vmem:[%s3 + $0x20] sm:$0xf]
    %v711 = vld [vmem:[%s3 + $0x24] sm:$0xf]
    %v712 = vld [vmem:[%s3 + $0x28] sm:$0xf]
    %v713 = vld [vmem:[%s3 + $0x2c] sm:$0xf]
    %v714 = vld [vmem:[%s3 + $0x30] sm:$0xf]
    %v715 = vld [vmem:[%s3 + $0x34] sm:$0xf]
    %v716 = vld [vmem:[%s3 + $0x38] sm:$0xf]
    %v717 = vld [vmem:[%s3 + $0x3c] sm:$0xf]
    %v718 = vld [vmem:[%s4] sm:$0x1]
    %v720 = vlaneseq
    %v721 = vshrl.u32 %v720, 7
    %v722 = vsub.s32 0, %v721
    %v723 = vrot.slane %v718, %v722
    %v741 = vunpack.c.l.b16 %v702
    %v742 = vunpack.c.l.b16 %v703
    %v743 = vunpack.c.l.b16 %v704
    %v744 = vunpack.c.l.b16 %v705
    %v745 = vunpack.c.l.b16 %v706
    %v746 = vunpack.c.l.b16 %v707
    %v747 = vunpack.c.l.b16 %v708
    %v748 = vunpack.c.l.b16 %v709
    %v749 = vunpack.c.l.b16 %v710
    %v750 = vunpack.c.l.b16 %v711
    %v751 = vunpack.c.l.b16 %v712
    %v752 = vunpack.c.l.b16 %v713
    %v753 = vunpack.c.l.b16 %v714
    %v754 = vunpack.c.l.b16 %v715
    %v755 = vunpack.c.l.b16 %v716
    %v756 = vunpack.c.l.b16 %v717
    %v757 = vpack.c.b16 %v742, %v741
    %v758 = vpack.c.b16 %v744, %v743
    %v759 = vpack.c.b16 %v746, %v745
    %v760 = vpack.c.b16 %v748, %v747
    %v761 = vpack.c.b16 %v750, %v749
    %v762 = vpack.c.b16 %v752, %v751
    %v763 = vpack.c.b16 %v754, %v753
    %v764 = vpack.c.b16 %v756, %v755
    %773 = vmatprep.subr.bf16.mxu0 0
    %774 = vmatpush1.bf16.msra.mxu0 %v757
    %775 = vmatprep.subr.bf16.mxu0 0
    %776 = vmatpush1.bf16.msra.mxu0 %v758
    %777 = vmatprep.subr.bf16.mxu0 0
    %778 = vmatpush1.bf16.msra.mxu0 %v759
    %779 = vmatprep.subr.bf16.mxu0 0
    %780 = vmatpush1.bf16.msra.mxu0 %v760
    %781 = vmatprep.subr.bf16.mxu0 0
    %782 = vmatpush1.bf16.msra.mxu0 %v761
    %783 = vmatprep.subr.bf16.mxu0 0
    %784 = vmatpush1.bf16.msra.mxu0 %v762
    %785 = vmatprep.subr.bf16.mxu0 0
    %786 = vmatpush1.bf16.msra.mxu0 %v763
    %787 = vmatprep.subr.bf16.mxu0 0
    %788 = vmatpush1.bf16.msra.mxu0 %v764
    %789 = vmatprep.subr.bf16.mxu0 0
    %790 = vmatpush1.bf16.msra.mxu0 0
    %791 = vmatprep.subr.bf16.mxu0 0
    %792 = vmatpush1.bf16.msra.mxu0 0
    %793 = vmatprep.subr.bf16.mxu0 0
    %794 = vmatpush1.bf16.msra.mxu0 0
    %795 = vmatprep.subr.bf16.mxu0 0
    %796 = vmatpush1.bf16.msra.mxu0 0
    %797 = vmatprep.subr.bf16.mxu0 0
    %798 = vmatpush1.bf16.msra.mxu0 0
    %799 = vmatprep.subr.bf16.mxu0 0
    %800 = vmatpush1.bf16.msra.mxu0 0
    %801 = vmatprep.subr.bf16.mxu0 0
    %802 = vmatpush1.bf16.msra.mxu0 0
    %803 = vmatprep.subr.bf16.mxu0 0
    %804 = vmatpush1.bf16.msra.mxu0 0
    %805 = vmatprep.mubr.bf16.mxu0 0
    %806 = vmatmul.mubr.bf16.gmra.mrb[0].mxu0 %v701
    %v807 = vpop.f32.mrb[0].mxu0
    %v808 = vadd.f32 %v723, %v807
    %v809 = vpop.f32.mrb[0].mxu0
    %v810 = vpop.f32.mrb[0].mxu0
    %v811 = vpop.f32.mrb[0].mxu0
    %812 = vdwg.mxu0
    %813 = vst [vmem:[#allocation5] sm:$0xff] %v808
    // Predicated region
    $region26: #{fashion_mnist_net.1} parent=1 // pred_check
      _
    $region27: #{fashion_mnist_net.1} parent=1 // pred_check_branch
      %815 = sbr.rel (0) target = $region29
    $region28: #{fashion_mnist_net.1} parent=1 // pred_region
      %s817 = ssub.s32 128, 32
      %818 = vsyncadd [#allocation4], %s817
      %s819 = sshll.u32 [#allocation5], 4
      %s820 = int_to_ptr.vmem [resolvable:$true] %s819
      %825 = dma.vmem_to_hbm [thread:$0]  %s820, 32, %s5, [#allocation4], 32, 32, 2
    $region29: #{fashion_mnist_net.1} parent=1 // pred_fallthru
      _
    // Predicated region
    $region30: #{fashion_mnist_net.1} parent=1 // pred_check
      _
    $region31: #{fashion_mnist_net.1} parent=1 // pred_check_branch
      %827 = sbr.rel (0) target = $region33
    $region32: #{fashion_mnist_net.1} parent=1 // pred_region
      %828 = dma.done [#allocation4], 128
    $region33: #{fashion_mnist_net.1} parent=1 // pred_fallthru
      _
    %829 = vsyncpa [#allocation3], 1
    %830 = vsyncpa [#allocation4], 1

</llo_original>
